<compile_context>
chip_gen: v7x
topology: tpu7x:2x2x1
jax: 0.10.0
libtpu: 0.0.40
codegen_flags: <defaults>
</compile_context>

<pallas_src>
import jax
import jax.numpy as jnp
from jax.experimental import pallas as pl
from jax.experimental.pallas import tpu as pltpu

LANES = 128
SUBLANES = 8


def _tanh_kernel(x_ref, o_ref):
    # Cast to f32 in-vreg (VPU), tanh on the EUP transcendental unit,
    # cast to the output dtype on the store.
    o_ref[...] = jnp.tanh(x_ref[...].astype(jnp.float32)).astype(o_ref.dtype)


def _round_up(x: int, m: int) -> int:
    return ((x + m - 1) // m) * m


def _sublane_multiple(*dtypes) -> int:
    """Sublane alignment that keeps packed (sub-32-bit) layouts happy."""
    m = SUBLANES
    for dt in dtypes:
        m = max(m, SUBLANES * (4 // jnp.dtype(dt).itemsize))
    return m


def _chip_tiling():
    """(tile_rows, vmem_limit_bytes) per TPU generation."""
    try:
        kind = jax.devices()[0].device_kind.lower()
    except Exception:  # pragma: no cover - defensive
        kind = ""
    if "v6" in kind or "trillium" in kind:
        # 128 MiB physical VMEM; state the scoped limit explicitly so the
        # ~16 MiB double-buffered working set is comfortably covered.
        return 8192, 48 << 20
    if "v7" in kind:
        # 64 MiB-per-TC VMEM; 16 MiB working set fits the 32 MiB default.
        return 8192, None
    # v5e / unknown: 16 MiB default scoped limit -> keep the 8 MiB working set.
    return 4096, None


def tanh_forward(
    x: jax.Array,
    *,
    out_dtype=jnp.float32,
    tile_rows: int | None = None,
    small_n_threshold: int = 65536,
) -> jax.Array:
    """Elementwise tanh via a Pallas TPU kernel.

    Accepts any shape/dtype; returns ``out_dtype`` (default float32, the TPU
    stand-in for the reference's float64 upcast) with the same shape.
    """
    orig_shape = x.shape
    n = x.size
    if n == 0:
        return jnp.zeros(orig_shape, out_dtype)

    # Small inputs: pallas_call launch + DMA setup overhead dominates.
    if n < small_n_threshold:
        return jnp.tanh(x.astype(jnp.float32)).astype(out_dtype)

    chip_tile_rows, vmem_limit = _chip_tiling()
    if tile_rows is None:
        tile_rows = chip_tile_rows

    rows = pl.cdiv(n, LANES)
    n_pad128 = rows * LANES

    # Zero-copy when n is already lane-aligned; otherwise pad <= 127 elements.
    x_flat = x.reshape(-1)
    lane_ragged = n_pad128 != n
    if lane_ragged:
        x_flat = jnp.pad(x_flat, (0, n_pad128 - n))
    x2d = x_flat.reshape(rows, LANES)

    # Row-tile selection: never a single giant block for mid-size inputs
    # (keeps double-buffering alive and both v7x TCs busy), never rounded up
    # to a tile multiple (the trailing partial block is masked by Pallas).
    sub = _sublane_multiple(x.dtype, out_dtype)
    rows_sub = _round_up(rows, sub)
    if rows_sub <= 256:
        tr = rows_sub
    elif rows <= tile_rows:
        tr = max(256, _round_up(pl.cdiv(rows, 8), sub))  # aim for ~8 blocks
    else:
        tr = tile_rows
    num_blocks = pl.cdiv(rows, tr)

    in_bytes = n_pad128 * jnp.dtype(x.dtype).itemsize
    out_bytes = n_pad128 * jnp.dtype(out_dtype).itemsize

    out2d = pl.pallas_call(
        _tanh_kernel,
        out_shape=jax.ShapeDtypeStruct((rows, LANES), out_dtype),
        grid_spec=pltpu.PrefetchScalarGridSpec(
            num_scalar_prefetch=0,
            grid=(num_blocks,),
            in_specs=[pl.BlockSpec((tr, LANES), lambda i: (i, 0))],
            out_specs=pl.BlockSpec((tr, LANES), lambda i: (i, 0)),
        ),
        compiler_params=pltpu.CompilerParams(
            dimension_semantics=("parallel",),
            vmem_limit_bytes=vmem_limit,
        ),
        cost_estimate=pl.CostEstimate(
            flops=0,
            transcendentals=n_pad128,
            bytes_accessed=in_bytes + out_bytes,
        ),
    )(x2d)

    if lane_ragged:
        return out2d.reshape(-1)[:n].reshape(orig_shape)
    return out2d.reshape(orig_shape)


if __name__ == "__main__":
    key = jax.random.PRNGKey(0)
    k1, k2, k3 = jax.random.split(key, 3)

    # 1) Small NCHW-like input (module forward(data)) -> XLA fallback path.
    x_small = jax.random.normal(k1, (2, 4, 16, 16), dtype=jnp.float32) * 2.0
    y_small = tanh_forward(x_small)
    jax.block_until_ready(y_small)
    assert y_small.shape == x_small.shape and y_small.dtype == jnp.float32
    assert jnp.max(jnp.abs(y_small - jnp.tanh(x_small))) < 1e-6

    # 2) 64K-element f32 input -> Pallas kernel path, multi-block grid.
    x_mid = jax.random.normal(k2, (4, 4, 64, 64), dtype=jnp.float32) * 2.0
    y_mid = tanh_forward(x_mid)
    jax.block_until_ready(y_mid)
    assert y_mid.shape == x_mid.shape and y_mid.dtype == jnp.float32
    assert jnp.max(jnp.abs(y_mid - jnp.tanh(x_mid))) < 1e-6

    # 3) Ragged bf16 input forced through the kernel (pad-to-128 + slice path),
    #    bf16 output exercising out_dtype and the in-kernel up/down cast.
    x_r = (jax.random.normal(k3, (3, 5, 7), dtype=jnp.float32) * 2.0).astype(
        jnp.bfloat16
    )
    y_r = tanh_forward(x_r, out_dtype=jnp.bfloat16, small_n_threshold=0)
    jax.block_until_ready(y_r)
    y_r_ref = jnp.tanh(x_r.astype(jnp.float32)).astype(jnp.bfloat16)
    assert y_r.shape == x_r.shape and y_r.dtype == jnp.bfloat16
    assert (
        jnp.max(
            jnp.abs(y_r.astype(jnp.float32) - y_r_ref.astype(jnp.float32))
        )
        < 2e-2
    )

    print("KERNEL_OK")
</pallas_src>

<mosaic_0001>
module attributes {stable_mosaic.version = 11 : i64} {
  func.func @_tanh_kernel(%arg0: i32, %arg1: memref<256x128xf32, #tpu.memory_space<vmem>>, %arg2: memref<256x128xf32, #tpu.memory_space<vmem>>) attributes {dimension_semantics = [#tpu.dimension_semantics<parallel>], iteration_bounds = array<i64: 2>, scalar_prefetch = 0 : i64, scratch_operands = 0 : i64, tpu.core_type = #tpu.core_type<tc>, window_params = [{transform_indices = @transform_0, window_bounds = array<i64: 256, 128>}, {transform_indices = @transform_1, window_bounds = array<i64: 256, 128>}]} {
    %c0 = arith.constant 0 : index
    %c0_0 = arith.constant 0 : index
    %0 = vector.load %arg1[%c0, %c0_0] : memref<256x128xf32, #tpu.memory_space<vmem>>, vector<256x128xf32>
    %1 = math.tanh %0 : vector<256x128xf32>
    %c0_1 = arith.constant 0 : index
    %c0_2 = arith.constant 0 : index
    %2 = vector.load %arg2[%c0_1, %c0_2] : memref<256x128xf32, #tpu.memory_space<vmem>>, vector<256x128xf32>
    tpu.vector_store %arg2[%c0_1, %c0_2], %1 {strides = array<i32>} : memref<256x128xf32, #tpu.memory_space<vmem>>, vector<256x128xf32>,
    return
  }
  func.func @transform_0(%arg0: i32) -> (i32, i32) {
    %c0_i32 = arith.constant 0 : i32
    %c0_i32_0 = arith.constant 0 : i32
    return %arg0, %c0_i32 : i32, i32
  }
  func.func @transform_1(%arg0: i32) -> (i32, i32) {
    %c0_i32 = arith.constant 0 : i32
    %c0_i32_0 = arith.constant 0 : i32
    return %arg0, %c0_i32 : i32, i32
  }
}

</mosaic_0001>

<llo_original>
// kernel: tpu_custom_call.1
$region0: #{tpu_custom_call.1}
  #allocation0 [shape = 'u32[]', space=smem, size = 0x4, offset = 0x4, fixed_abs, tag = 'smem constant byte address 0x4 - core index']
  #allocation1 [shape = 'u32[144,128]{1,0:T(1,128)}', space=vmem, size = 0x12000, scoped, tag = 'internal scratch']
  %s0 = inlined_call_operand.hbm [shape: f32[512,128], index: 0, kind: input, shape index: {}]
  %s1 = inlined_call_operand.hbm [shape: f32[512,128], index: 1, kind: output, shape index: {}]
  %s2 = sld [smem:[#allocation0]]
  $region41: #{tpu_custom_call.1} parent=0
    _
  %s4 = ssub.s32 1, %s2
  %s5 = scalar_select 0, %s4, %s2
  $region1: #{tpu_custom_call.1} parent=0
    #allocation2 [shape = 'u8[262144]{0}', space=vmem, size = 0x40000, scoped, tag = 'input window, operand 0']
    #allocation3 [shape = 's32[2]{0}', space=sflag, size = 0x8, scoped, tag = 'scoped memory for tpu_custom_call.1']
    #allocation4 [shape = 's32[2]{0}', space=sflag, size = 0x8, scoped, tag = 'scoped memory for tpu_custom_call.1']
    #allocation5 [shape = 'u8[262144]{0}', space=vmem, size = 0x40000, scoped, tag = 'output window, operand 0']
    %6 = vsyncpa [#allocation3], 0
    %s7 = scalar_lea.sflag [#allocation3], 1
    %8 = vsyncpa %s7, 0
    %9 = vsyncpa [#allocation4], 0
    %s10 = scalar_lea.sflag [#allocation4], 1
    %11 = vsyncpa %s10, 0
    loop: start=0, step=1, limit=4
    $region2: #{tpu_custom_call.1} parent=1 // loop_pre_header
      _
    $region3: #{tpu_custom_call.1} parent=1 // loop_header
      %s13 = sphi 0, %s17
      %p14 = scmp.ge.s32.totalorder %s13, 4
      %s23 = sphi 0, %s25
      %s26 = sphi 0, %s23
      %s27 = sphi 0, %s26
      %s43 = sphi 0, %s27
      %s49 = sphi 0, %s51
      %s52 = sphi 0, %s49
      %s53 = sphi 0, %s52
      %s69 = sphi 0, %s53
    $region4: #{tpu_custom_call.1} parent=1 // loop_header_branch
      %16 = sbr.rel (%p14) target = $region8
    $region5: #{tpu_custom_call.1} parent=1 // loop_body
      %s18 = ssub.s32 %s13, 1
      %s19 = ssub.s32 %s13, 2
      %s20 = sadd.s32 %s13, 1
      %s21 = ssub.s32 %s13, %s20
      %p22 = scmp.eq.s32.totalorder %s21, 0
      %s24 = sadd.s32 %s23, 1
      %s25 = scalar_select %p22, %s23, %s24
      %p28 = pneg %p22
      %p29 = scmp.eq.s32.totalorder %s13, 1
      %p30 = por %p28, %p29
      %p31 = scmp.ne.s32.totalorder %s23, %s26
      %p32 = scmp.eq.s32.totalorder %s13, 0
      %p33 = por %p31, %p32
      %p34 = scmp.ne.s32.totalorder %s23, %s26
      %p35 = scmp.eq.s32.totalorder %s18, 1
      %p36 = por %p34, %p35
      %p37 = scmp.ne.s32.totalorder %s26, %s27
      %p38 = scmp.eq.s32.totalorder %s18, 0
      %p39 = por %p37, %p38
      %p40 = scmp.ne.s32.totalorder %s26, %s27
      %p41 = scmp.eq.s32.totalorder %s19, 1
      %p42 = por %p40, %p41
      %p44 = scmp.ne.s32.totalorder %s27, %s43
      %p45 = scmp.eq.s32.totalorder %s19, 0
      %p46 = por %p44, %p45
      %s47 = ssub.s32 %s13, %s20
      %p48 = scmp.eq.s32.totalorder %s47, 0
      %s50 = sadd.s32 %s49, 1
      %s51 = scalar_select %p48, %s49, %s50
      %p54 = pneg %p48
      %p55 = scmp.eq.s32.totalorder %s13, 1
      %p56 = por %p54, %p55
      %p57 = scmp.ne.s32.totalorder %s49, %s52
      %p58 = scmp.eq.s32.totalorder %s13, 0
      %p59 = por %p57, %p58
      %p60 = scmp.ne.s32.totalorder %s49, %s52
      %p61 = scmp.eq.s32.totalorder %s18, 1
      %p62 = por %p60, %p61
      %p63 = scmp.ne.s32.totalorder %s52, %s53
      %p64 = scmp.eq.s32.totalorder %s18, 0
      %p65 = por %p63, %p64
      %p66 = scmp.ne.s32.totalorder %s52, %s53
      %p67 = scmp.eq.s32.totalorder %s19, 1
      %p68 = por %p66, %p67
      %p70 = scmp.ne.s32.totalorder %s53, %s69
      %p71 = scmp.eq.s32.totalorder %s19, 0
      %p72 = por %p70, %p71
      %p73 = scmp.le.s32.totalorder 1, %s13
      %p74 = scmp.lt.s32.totalorder %s13, 3
      %p75 = pnand %p73, %p74
      %p76 = pneg %p75
      // Predicated region
      $region9: #{tpu_custom_call.1} parent=5 // pred_check
        _
      $region10: #{tpu_custom_call.1} parent=5 // pred_check_branch
        %78 = sbr.rel (%p75) target = $region12
      $region11: #{tpu_custom_call.1} parent=5 // pred_region
        %s79 = ssub.s32 %s13, 1
      $region12: #{tpu_custom_call.1} parent=5 // pred_fallthru
        _
      %p80 = scmp.lt.s32.totalorder %s13, 2
      // Predicated region
      $region13: #{tpu_custom_call.1} parent=5 // pred_check
        %p81 = pneg %p80
      $region14: #{tpu_custom_call.1} parent=5 // pred_check_branch
        %83 = sbr.rel (%p81) target = $region16
      $region15: #{tpu_custom_call.1} parent=5 // pred_region
        // Predicated region
        $region17: #{tpu_custom_call.1} parent=15 // pred_check
          %p84 = pneg %p33
        $region18: #{tpu_custom_call.1} parent=15 // pred_check_branch
          %86 = sbr.rel (%p84) target = $region20
        $region19: #{tpu_custom_call.1} parent=15 // pred_region
          %s87 = sand.u32 %s23, 1
          %s88 = scalar_lea.sflag [#allocation3], %s87
          %s89 = sand.u32 %s23, 1
          %s90 = smul.addr %s89, 256
          %s91 = scalar_lea.vmem [#allocation2], %s90
          %s92 = smul.u32 32, %s13
          %s94 = ssub.s32 4096, 4096
          %95 = vsyncadd %s88, %s94
          %s96 = smul.addr %s92, 128
          %s97 = scalar_lea.hbm %s0, %s96
          %s98 = sshll.u32 %s91, 4
          %s99 = int_to_ptr.vmem [resolvable:$true] %s98
          %104 = dma.hbm_to_vmem [thread:$0]  %s97, 4096, %s99, %s88, 128, 128, 8
        $region20: #{tpu_custom_call.1} parent=15 // pred_fallthru
          _
      $region16: #{tpu_custom_call.1} parent=5 // pred_fallthru
        _
      %p105 = scmp.le.s32.totalorder 1, %s13
      %p106 = scmp.lt.s32.totalorder %s13, 3
      %p107 = pnand %p105, %p106
      %p108 = pneg %p107
      // Predicated region
      $region21: #{tpu_custom_call.1} parent=5 // pred_check
        _
      $region22: #{tpu_custom_call.1} parent=5 // pred_check_branch
        %110 = sbr.rel (%p107) target = $region24
      $region23: #{tpu_custom_call.1} parent=5 // pred_region
        %s111 = ssub.s32 %s13, 1
        %s112 = sand.u32 %s26, 1
        %s113 = scalar_lea.sflag [#allocation3], %s112
        %s114 = sand.u32 %s26, 1
        %s115 = smul.addr %s114, 256
        %s116 = scalar_lea.vmem [#allocation2], %s115
        // Predicated region
        $region25: #{tpu_custom_call.1} parent=23 // pred_check
          %p117 = pneg %p39
        $region26: #{tpu_custom_call.1} parent=23 // pred_check_branch
          %119 = sbr.rel (%p117) target = $region28
        $region27: #{tpu_custom_call.1} parent=23 // pred_region
          %120 = dma.done %s113, 4096
        $region28: #{tpu_custom_call.1} parent=23 // pred_fallthru
          _
        %s121 = sand.u32 %s26, 1
        %s122 = scalar_lea.sflag [#allocation3], %s121
        %s123 = sand.u32 %s26, 1
        %s124 = smul.addr %s123, 256
        %s125 = scalar_lea.vmem [#allocation2], %s124
        %p126 = pneg %p39
        %p127 = pneg %p36
        %p128 = pneg %p65
        %p129 = pneg %p62
        %s130 = sand.u32 %s52, 1
        %s131 = scalar_lea.sflag [#allocation4], %s130
        %s132 = sand.u32 %s52, 1
        %s133 = smul.addr %s132, 256
        %s134 = scalar_lea.vmem [#allocation5], %s133
        %s135 = smul.u32 32, %s18
        %s136 = smul.u32 32, %s18
        %v137 = vld [vmem:[%s116] sm:$0xff]
        %v138 = vld [vmem:[%s116 + $0x8] sm:$0xff]
        %v139 = vld [vmem:[%s116 + $0x10] sm:$0xff]
        %v140 = vld [vmem:[%s116 + $0x18] sm:$0xff]
        %v141 = vld [vmem:[%s116 + $0x20] sm:$0xff]
        %v142 = vld [vmem:[%s116 + $0x28] sm:$0xff]
        %v143 = vld [vmem:[%s116 + $0x30] sm:$0xff]
        %v144 = vld [vmem:[%s116 + $0x38] sm:$0xff]
        %v145 = vld [vmem:[%s116 + $0x40] sm:$0xff]
        %v146 = vld [vmem:[%s116 + $0x48] sm:$0xff]
        %v147 = vld [vmem:[%s116 + $0x50] sm:$0xff]
        %v148 = vld [vmem:[%s116 + $0x58] sm:$0xff]
        %v149 = vld [vmem:[%s116 + $0x60] sm:$0xff]
        %v150 = vld [vmem:[%s116 + $0x68] sm:$0xff]
        %v151 = vld [vmem:[%s116 + $0x70] sm:$0xff]
        %v152 = vld [vmem:[%s116 + $0x78] sm:$0xff]
        %v153 = vld [vmem:[%s116 + $0x80] sm:$0xff]
        %v154 = vld [vmem:[%s116 + $0x88] sm:$0xff]
        %v155 = vld [vmem:[%s116 + $0x90] sm:$0xff]
        %v156 = vld [vmem:[%s116 + $0x98] sm:$0xff]
        %v157 = vld [vmem:[%s116 + $0xa0] sm:$0xff]
        %v158 = vld [vmem:[%s116 + $0xa8] sm:$0xff]
        %v159 = vld [vmem:[%s116 + $0xb0] sm:$0xff]
        %v160 = vld [vmem:[%s116 + $0xb8] sm:$0xff]
        %v161 = vld [vmem:[%s116 + $0xc0] sm:$0xff]
        %v162 = vld [vmem:[%s116 + $0xc8] sm:$0xff]
        %v163 = vld [vmem:[%s116 + $0xd0] sm:$0xff]
        %v164 = vld [vmem:[%s116 + $0xd8] sm:$0xff]
        %v165 = vld [vmem:[%s116 + $0xe0] sm:$0xff]
        %v166 = vld [vmem:[%s116 + $0xe8] sm:$0xff]
        %v167 = vld [vmem:[%s116 + $0xf0] sm:$0xff]
        %v168 = vld [vmem:[%s116 + $0xf8] sm:$0xff]
        %v169 = vtanh.pop %v137
        %v170 = vtanh.pop %v138
        %v171 = vtanh.pop %v139
        %v172 = vtanh.pop %v140
        %v173 = vtanh.pop %v141
        %v174 = vtanh.pop %v142
        %v175 = vtanh.pop %v143
        %v176 = vtanh.pop %v144
        %v177 = vtanh.pop %v145
        %v178 = vtanh.pop %v146
        %v179 = vtanh.pop %v147
        %v180 = vtanh.pop %v148
        %v181 = vtanh.pop %v149
        %v182 = vtanh.pop %v150
        %v183 = vtanh.pop %v151
        %v184 = vtanh.pop %v152
        %v185 = vtanh.pop %v153
        %v186 = vtanh.pop %v154
        %v187 = vtanh.pop %v155
        %v188 = vtanh.pop %v156
        %v189 = vtanh.pop %v157
        %v190 = vtanh.pop %v158
        %v191 = vtanh.pop %v159
        %v192 = vtanh.pop %v160
        %v193 = vtanh.pop %v161
        %v194 = vtanh.pop %v162
        %v195 = vtanh.pop %v163
        %v196 = vtanh.pop %v164
        %v197 = vtanh.pop %v165
        %v198 = vtanh.pop %v166
        %v199 = vtanh.pop %v167
        %v200 = vtanh.pop %v168
        %201 = vst [vmem:[%s134] sm:$0xff] %v169
        %202 = vst [vmem:[%s134 + $0x8] sm:$0xff] %v170
        %203 = vst [vmem:[%s134 + $0x10] sm:$0xff] %v171
        %204 = vst [vmem:[%s134 + $0x18] sm:$0xff] %v172
        %205 = vst [vmem:[%s134 + $0x20] sm:$0xff] %v173
        %206 = vst [vmem:[%s134 + $0x28] sm:$0xff] %v174
        %207 = vst [vmem:[%s134 + $0x30] sm:$0xff] %v175
        %208 = vst [vmem:[%s134 + $0x38] sm:$0xff] %v176
        %209 = vst [vmem:[%s134 + $0x40] sm:$0xff] %v177
        %210 = vst [vmem:[%s134 + $0x48] sm:$0xff] %v178
        %211 = vst [vmem:[%s134 + $0x50] sm:$0xff] %v179
        %212 = vst [vmem:[%s134 + $0x58] sm:$0xff] %v180
        %213 = vst [vmem:[%s134 + $0x60] sm:$0xff] %v181
        %214 = vst [vmem:[%s134 + $0x68] sm:$0xff] %v182
        %215 = vst [vmem:[%s134 + $0x70] sm:$0xff] %v183
        %216 = vst [vmem:[%s134 + $0x78] sm:$0xff] %v184
        %217 = vst [vmem:[%s134 + $0x80] sm:$0xff] %v185
        %218 = vst [vmem:[%s134 + $0x88] sm:$0xff] %v186
        %219 = vst [vmem:[%s134 + $0x90] sm:$0xff] %v187
        %220 = vst [vmem:[%s134 + $0x98] sm:$0xff] %v188
        %221 = vst [vmem:[%s134 + $0xa0] sm:$0xff] %v189
        %222 = vst [vmem:[%s134 + $0xa8] sm:$0xff] %v190
        %223 = vst [vmem:[%s134 + $0xb0] sm:$0xff] %v191
        %224 = vst [vmem:[%s134 + $0xb8] sm:$0xff] %v192
        %225 = vst [vmem:[%s134 + $0xc0] sm:$0xff] %v193
        %226 = vst [vmem:[%s134 + $0xc8] sm:$0xff] %v194
        %227 = vst [vmem:[%s134 + $0xd0] sm:$0xff] %v195
        %228 = vst [vmem:[%s134 + $0xd8] sm:$0xff] %v196
        %229 = vst [vmem:[%s134 + $0xe0] sm:$0xff] %v197
        %230 = vst [vmem:[%s134 + $0xe8] sm:$0xff] %v198
        %231 = vst [vmem:[%s134 + $0xf0] sm:$0xff] %v199
        %232 = vst [vmem:[%s134 + $0xf8] sm:$0xff] %v200
        %s233 = sand.u32 %s52, 1
        %s234 = scalar_lea.sflag [#allocation4], %s233
        %s235 = sand.u32 %s52, 1
        %s236 = smul.addr %s235, 256
        %s237 = scalar_lea.vmem [#allocation5], %s236
        // Predicated region
        $region29: #{tpu_custom_call.1} parent=23 // pred_check
          %p238 = pneg %p62
        $region30: #{tpu_custom_call.1} parent=23 // pred_check_branch
          %240 = sbr.rel (%p238) target = $region32
        $region31: #{tpu_custom_call.1} parent=23 // pred_region
          %s241 = smul.u32 32, %s18
          %s243 = ssub.s32 4096, 4096
          %244 = vsyncadd %s234, %s243
          %s245 = smul.addr %s241, 128
          %s246 = scalar_lea.hbm %s1, %s245
          %s247 = sshll.u32 %s237, 4
          %s248 = int_to_ptr.vmem [resolvable:$true] %s247
          %253 = dma.vmem_to_hbm [thread:$0]  %s248, 4096, %s246, %s234, 128, 128, 8
        $region32: #{tpu_custom_call.1} parent=23 // pred_fallthru
          _
      $region24: #{tpu_custom_call.1} parent=5 // pred_fallthru
        _
      %p254 = scmp.le.s32.totalorder 2, %s13
      // Predicated region
      $region33: #{tpu_custom_call.1} parent=5 // pred_check
        %p255 = pneg %p254
      $region34: #{tpu_custom_call.1} parent=5 // pred_check_branch
        %257 = sbr.rel (%p255) target = $region36
      $region35: #{tpu_custom_call.1} parent=5 // pred_region
        %s258 = ssub.s32 %s13, 2
        // Predicated region
        $region37: #{tpu_custom_call.1} parent=35 // pred_check
          %p259 = pneg %p68
        $region38: #{tpu_custom_call.1} parent=35 // pred_check_branch
          %261 = sbr.rel (%p259) target = $region40
        $region39: #{tpu_custom_call.1} parent=35 // pred_region
          %s262 = sand.u32 %s53, 1
          %s263 = scalar_lea.sflag [#allocation4], %s262
          %s264 = sand.u32 %s53, 1
          %s265 = smul.addr %s264, 256
          %s266 = scalar_lea.vmem [#allocation5], %s265
          %267 = dma.done %s263, 4096
        $region40: #{tpu_custom_call.1} parent=35 // pred_fallthru
          _
      $region36: #{tpu_custom_call.1} parent=5 // pred_fallthru
        _
    $region6: #{tpu_custom_call.1} parent=1 // loop_footer
      %s17 = sadd.s32 1, %s13
    $region7: #{tpu_custom_call.1} parent=1 // loop_footer_branch
      %12 = sbr.rel target = $region3
    $region8: #{tpu_custom_call.1} parent=1 // loop_exit
      _
    %268 = vsyncpa [#allocation3], 1
    %s269 = scalar_lea.sflag [#allocation3], 1
    %270 = vsyncpa %s269, 1
    %271 = vsyncpa [#allocation4], 1
    %s272 = scalar_lea.sflag [#allocation4], 1
    %273 = vsyncpa %s272, 1

</llo_original>
